<compile_context>
chip_gen: v7x
topology: tpu7x:2x2x1
jax: 0.10.0
libtpu: 0.0.40
codegen_flags: <defaults>
</compile_context>

<pallas_src>
import math

import jax
import jax.numpy as jnp
from jax.experimental import pallas as pl
from jax.experimental.pallas import tpu as pltpu


def _mlp_kernel(x_ref, w1_ref, b1_ref, w2_ref, b2_ref, o_ref):
    # x_ref:  (TB, P*D)  bf16    w1_ref: (P*D, P*H) bf16   b1_ref: (1, P*H) f32
    # w2_ref: (P*H, P*D) bf16    b2_ref: (1, P*D)   f32    o_ref:  (TB, P*D) bf16
    h = jnp.dot(x_ref[...], w1_ref[...], preferred_element_type=jnp.float32)
    h = h + b1_ref[...]                      # time-conditioned bias (f32)
    h = h * jax.nn.sigmoid(h)                # SiLU in f32 (EUP)
    out = jnp.dot(h.astype(w2_ref.dtype), w2_ref[...],
                  preferred_element_type=jnp.float32)
    out = out + b2_ref[...]
    o_ref[...] = out.astype(o_ref.dtype)     # bf16 writeback: half the store bytes


def base_model_pallas(xp, w1_blk, b1_blk, w2_blk, b2_blk, *, block_rows=4096):
    """Packed CFM velocity MLP: lane-dense, batch-tiled, resident weights.

    xp:      (Rp, P*D)  bf16 packed activations (P batch rows per lane row)
    w1_blk:  (P*D, P*H) bf16 block-diagonal first-layer weights
    b1_blk:  (1, P*H)   f32  time-conditioned bias, tiled P times
    w2_blk:  (P*H, P*D) bf16 block-diagonal second-layer weights
    b2_blk:  (1, P*D)   f32  output bias, tiled P times
    """
    Rp, WP = xp.shape
    DP, HP = w1_blk.shape

    # Tile (in packed rows): big enough to amortize ~0.35 us/step grid overhead,
    # multiple of 8 (sublane) unless it covers the whole batch, and chosen so
    # the grid keeps >= 2 steps when possible (v7x megacore sharding).
    if Rp <= 16:
        TB = Rp
    else:
        TB = min(block_rows, 8 * pl.cdiv(pl.cdiv(Rp, 2), 8))
    grid = (pl.cdiv(Rp, TB),)   # non-divisible tail block is masked by Pallas

    return pl.pallas_call(
        _mlp_kernel,
        out_shape=jax.ShapeDtypeStruct((Rp, WP), jnp.bfloat16),
        grid=grid,
        in_specs=[
            pl.BlockSpec((TB, WP), lambda i: (i, 0)),   # xp: streamed per tile
            pl.BlockSpec((DP, HP), lambda i: (0, 0)),   # w1 block-diag: resident
            pl.BlockSpec((1, HP), lambda i: (0, 0)),    # b1_eff tiled: resident
            pl.BlockSpec((HP, DP), lambda i: (0, 0)),   # w2 block-diag: resident
            pl.BlockSpec((1, DP), lambda i: (0, 0)),    # b2 tiled: resident
        ],
        out_specs=pl.BlockSpec((TB, WP), lambda i: (i, 0)),
        compiler_params=pltpu.CompilerParams(
            dimension_semantics=("parallel",),          # megacore on v7x
            vmem_limit_bytes=48 * 1024 * 1024,          # safe on v7x's 64 MiB
        ),
    )(xp, w1_blk, b1_blk, w2_blk, b2_blk)


def _fold_and_pack_params(t, params, d_in, pack):
    """Fold the scalar flow time into the first-layer bias and build the
    block-diagonal, lane-dense weights (tiny one-time JAX ops)."""
    w1 = params["w1"]                                   # (D+1, H) bf16
    w1_main = w1[:d_in]                                 # (D, H)
    w1_time = w1[d_in].astype(jnp.float32)[None, :]     # (1, H)
    t_scalar = jnp.reshape(t, ()).astype(jnp.float32)
    b1_eff = params["b1"] + t_scalar * w1_time          # (1, H) f32

    eye = jnp.eye(pack, dtype=w1.dtype)
    w1_blk = jnp.kron(eye, w1_main)                     # (P*D, P*H) bf16
    w2_blk = jnp.kron(eye, params["w2"])                # (P*H, P*D) bf16
    b1_blk = jnp.tile(b1_eff, (1, pack))                # (1, P*H) f32
    b2_blk = jnp.tile(params["b2"], (1, pack))          # (1, P*D) f32
    return w1_blk, b1_blk, w2_blk, b2_blk


def model_wrapper_no_context_forward(t, x, params):
    """Semantics of ModelWrapperNoContext.forward(t, x).

    t is the (scalar / size-1) flow time that `t.expand(B, 1)` broadcasts over
    the batch; instead of materializing the (B, 1) column and concatenating it
    onto x, its contribution is folded into the first-layer bias.
    """
    # TODO(synk): a per-sample t (distinct values per row, common in CFM
    # training) cannot be folded into a shared bias; it would need a per-row
    # bias input path. The wrapper spec only broadcasts a size-1 t.
    B, D = x.shape
    pack = 128 // D if (D <= 128 and 128 % D == 0) else 1

    w1_blk, b1_blk, w2_blk, b2_blk = _fold_and_pack_params(t, params, D, pack)

    x_bf = x.astype(w1_blk.dtype)
    rem = (-B) % pack
    if rem:                                    # rare: tiny (< pack rows) tail pad
        x_bf = jnp.pad(x_bf, ((0, rem), (0, 0)))
    xp = x_bf.reshape(-1, pack * D)            # contiguous, lane-dense packed view

    outp = base_model_pallas(xp, w1_blk, b1_blk, w2_blk, b2_blk)
    out = outp.reshape(-1, D)
    return out[:B] if rem else out


def init_params(key, d_in, hidden):
    """Deterministic init matching torch.nn.Linear defaults (weights in bf16)."""
    k1, k2, k3, k4 = jax.random.split(key, 4)
    lim1 = 1.0 / math.sqrt(d_in + 1)
    lim2 = 1.0 / math.sqrt(hidden)
    return {
        "w1": jax.random.uniform(k1, (d_in + 1, hidden), jnp.float32,
                                 -lim1, lim1).astype(jnp.bfloat16),
        "b1": jax.random.uniform(k2, (1, hidden), jnp.float32, -lim1, lim1),
        "w2": jax.random.uniform(k3, (hidden, d_in), jnp.float32,
                                 -lim2, lim2).astype(jnp.bfloat16),
        "b2": jax.random.uniform(k4, (1, d_in), jnp.float32, -lim2, lim2),
    }


def _reference_forward_matched(t, x, params):
    """Pure-JAX reference mirroring the kernel's bf16/f32 math (incl. bf16 out)."""
    _, D = x.shape
    t_scalar = jnp.reshape(t, ()).astype(jnp.float32)
    w1 = params["w1"]
    b1_eff = params["b1"] + t_scalar * w1[D].astype(jnp.float32)[None, :]
    x_bf = x.astype(w1.dtype)
    h = jnp.dot(x_bf, w1[:D], preferred_element_type=jnp.float32) + b1_eff
    h = h * jax.nn.sigmoid(h)
    out = jnp.dot(h.astype(params["w2"].dtype), params["w2"],
                  preferred_element_type=jnp.float32) + params["b2"]
    return out.astype(jnp.bfloat16)


def _reference_forward_concat_f32(t, x, params):
    """Original wrapper semantics (broadcast t, concat, f32 MLP) — loose check."""
    B = x.shape[0]
    t_b = jnp.broadcast_to(jnp.reshape(t, (1, 1)), (B, 1)).astype(jnp.float32)
    xt = jnp.concatenate([x.astype(jnp.float32), t_b], axis=-1)
    h = xt @ params["w1"].astype(jnp.float32) + params["b1"]
    h = h * jax.nn.sigmoid(h)
    return h @ params["w2"].astype(jnp.float32) + params["b2"]


def _check(out, t, x, params, tag):
    ref = _reference_forward_matched(t, x, params)
    assert jnp.allclose(out.astype(jnp.float32), ref.astype(jnp.float32),
                        atol=3e-2, rtol=3e-2), f"mismatch vs matched ref ({tag})"
    ref_f32 = _reference_forward_concat_f32(t, x, params)
    assert jnp.allclose(out.astype(jnp.float32), ref_f32,
                        atol=1e-1, rtol=1e-1), f"mismatch vs f32 concat ref ({tag})"


if __name__ == "__main__":
    key = jax.random.PRNGKey(0)
    k_x, k_t, k_p, k_x2, k_x3 = jax.random.split(key, 5)

    B, D, H = 8, 32, 64
    x = jax.random.normal(k_x, (B, D), dtype=jnp.float32)
    t = jax.random.uniform(k_t, (), dtype=jnp.float32)  # scalar flow time
    params = init_params(k_p, D, H)

    # Small-shape run (single packed block).
    out = jax.block_until_ready(model_wrapper_no_context_forward(t, x, params))
    assert out.shape == (B, D) and out.dtype == jnp.bfloat16
    _check(out, t, x, params, "small")

    # Batch grid with a masked (non-divisible) tail block — no pad/slice pass.
    B2 = 1000
    x2 = jax.random.normal(k_x2, (B2, D), dtype=jnp.float32)
    out2 = jax.block_until_ready(model_wrapper_no_context_forward(t, x2, params))
    assert out2.shape == (B2, D)
    _check(out2, t, x2, params, "tiled")

    # Batch not a multiple of the lane pack factor (tiny tail pad path).
    B3 = 10
    x3 = jax.random.normal(k_x3, (B3, D), dtype=jnp.float32)
    out3 = jax.block_until_ready(model_wrapper_no_context_forward(t, x3, params))
    assert out3.shape == (B3, D)
    _check(out3, t, x3, params, "pack-pad")

    print("KERNEL_OK")
</pallas_src>

<mosaic_0001>
module attributes {stable_mosaic.version = 11 : i64} {
  func.func @_mlp_kernel(%arg0: i32, %arg1: memref<2x128xbf16, #tpu.memory_space<vmem>>, %arg2: memref<128x256xbf16, #tpu.memory_space<vmem>>, %arg3: memref<1x256xf32, #tpu.memory_space<vmem>>, %arg4: memref<256x128xbf16, #tpu.memory_space<vmem>>, %arg5: memref<1x128xf32, #tpu.memory_space<vmem>>, %arg6: memref<2x128xbf16, #tpu.memory_space<vmem>>) attributes {dimension_semantics = [#tpu.dimension_semantics<parallel>], iteration_bounds = array<i64: 1>, scalar_prefetch = 0 : i64, scratch_operands = 0 : i64, tpu.core_type = #tpu.core_type<tc>, window_params = [{transform_indices = @transform_0, window_bounds = array<i64: 2, 128>}, {pipeline_mode = #tpu.pipeline_mode<synchronous>, transform_indices = @transform_1, window_bounds = array<i64: 128, 256>}, {pipeline_mode = #tpu.pipeline_mode<synchronous>, transform_indices = @transform_2, window_bounds = array<i64: 1, 256>}, {pipeline_mode = #tpu.pipeline_mode<synchronous>, transform_indices = @transform_3, window_bounds = array<i64: 256, 128>}, {pipeline_mode = #tpu.pipeline_mode<synchronous>, transform_indices = @transform_4, window_bounds = array<i64: 1, 128>}, {transform_indices = @transform_5, window_bounds = array<i64: 2, 128>}]} {
    %c0 = arith.constant 0 : index
    %c0_0 = arith.constant 0 : index
    %0 = vector.load %arg1[%c0, %c0_0] : memref<2x128xbf16, #tpu.memory_space<vmem>>, vector<2x128xbf16>
    %c0_1 = arith.constant 0 : index
    %c0_2 = arith.constant 0 : index
    %1 = vector.load %arg2[%c0_1, %c0_2] : memref<128x256xbf16, #tpu.memory_space<vmem>>, vector<128x256xbf16>
    %cst = arith.constant dense<0.000000e+00> : vector<2x256xf32>
    %2 = tpu.matmul %0, %1, %cst {dimension_numbers = #tpu.dot_dimension_numbers<[1], [0], [0], [1], [0, 0, 1, 1], [], []>} : vector<2x128xbf16>, vector<128x256xbf16>, vector<2x256xf32> -> vector<2x256xf32>
    %c0_3 = arith.constant 0 : index
    %c0_4 = arith.constant 0 : index
    %3 = vector.load %arg3[%c0_3, %c0_4] : memref<1x256xf32, #tpu.memory_space<vmem>>, vector<1x256xf32>
    %4 = vector.broadcast %3 : vector<1x256xf32> to vector<2x256xf32>
    %5 = arith.addf %2, %4 : vector<2x256xf32>
    %6 = arith.negf %5 : vector<2x256xf32>
    %7 = math.exp %6 : vector<2x256xf32>
    %cst_5 = arith.constant 1.000000e+00 : f32
    %8 = vector.broadcast %cst_5 : f32 to vector<2x256xf32>
    %9 = arith.addf %8, %7 : vector<2x256xf32>
    %10 = arith.divf %8, %9 : vector<2x256xf32>
    %11 = arith.mulf %5, %10 : vector<2x256xf32>
    %12 = arith.truncf %11 : vector<2x256xf32> to vector<2x256xbf16>
    %c0_6 = arith.constant 0 : index
    %c0_7 = arith.constant 0 : index
    %13 = vector.load %arg4[%c0_6, %c0_7] : memref<256x128xbf16, #tpu.memory_space<vmem>>, vector<256x128xbf16>
    %cst_8 = arith.constant dense<0.000000e+00> : vector<2x128xf32>
    %14 = tpu.matmul %12, %13, %cst_8 {dimension_numbers = #tpu.dot_dimension_numbers<[1], [0], [0], [1], [0, 0, 1, 1], [], []>} : vector<2x256xbf16>, vector<256x128xbf16>, vector<2x128xf32> -> vector<2x128xf32>
    %c0_9 = arith.constant 0 : index
    %c0_10 = arith.constant 0 : index
    %15 = vector.load %arg5[%c0_9, %c0_10] : memref<1x128xf32, #tpu.memory_space<vmem>>, vector<1x128xf32>
    %16 = vector.broadcast %15 : vector<1x128xf32> to vector<2x128xf32>
    %17 = arith.addf %14, %16 : vector<2x128xf32>
    %18 = arith.truncf %17 : vector<2x128xf32> to vector<2x128xbf16>
    %c0_11 = arith.constant 0 : index
    %c0_12 = arith.constant 0 : index
    %19 = vector.load %arg6[%c0_11, %c0_12] : memref<2x128xbf16, #tpu.memory_space<vmem>>, vector<2x128xbf16>
    tpu.vector_store %arg6[%c0_11, %c0_12], %18 {strides = array<i32>} : memref<2x128xbf16, #tpu.memory_space<vmem>>, vector<2x128xbf16>,
    return
  }
  func.func @transform_0(%arg0: i32) -> (i32, i32) {
    %c0_i32 = arith.constant 0 : i32
    %c0_i32_0 = arith.constant 0 : i32
    return %arg0, %c0_i32 : i32, i32
  }
  func.func @transform_1(%arg0: i32) -> (i32, i32) {
    %c0_i32 = arith.constant 0 : i32
    %c0_i32_0 = arith.constant 0 : i32
    %c0_i32_1 = arith.constant 0 : i32
    return %c0_i32, %c0_i32_0 : i32, i32
  }
  func.func @transform_2(%arg0: i32) -> (i32, i32) {
    %c0_i32 = arith.constant 0 : i32
    %c0_i32_0 = arith.constant 0 : i32
    %c0_i32_1 = arith.constant 0 : i32
    return %c0_i32, %c0_i32_0 : i32, i32
  }
  func.func @transform_3(%arg0: i32) -> (i32, i32) {
    %c0_i32 = arith.constant 0 : i32
    %c0_i32_0 = arith.constant 0 : i32
    %c0_i32_1 = arith.constant 0 : i32
    return %c0_i32, %c0_i32_0 : i32, i32
  }
  func.func @transform_4(%arg0: i32) -> (i32, i32) {
    %c0_i32 = arith.constant 0 : i32
    %c0_i32_0 = arith.constant 0 : i32
    %c0_i32_1 = arith.constant 0 : i32
    return %c0_i32, %c0_i32_0 : i32, i32
  }
  func.func @transform_5(%arg0: i32) -> (i32, i32) {
    %c0_i32 = arith.constant 0 : i32
    %c0_i32_0 = arith.constant 0 : i32
    return %arg0, %c0_i32 : i32, i32
  }
}

</mosaic_0001>

<llo_original>
// kernel: tpu_custom_call.1
$region0: #{tpu_custom_call.1}
  #allocation0 [shape = 'u32[]', space=smem, size = 0x4, offset = 0x4, fixed_abs, tag = 'smem constant byte address 0x4 - core index']
  #allocation1 [shape = 'u32[144,128]{1,0:T(1,128)}', space=vmem, size = 0x12000, scoped, tag = 'internal scratch']
  %s0 = inlined_call_operand.hbm [shape: bf16[2,128], index: 0, kind: input, shape index: {}]
  %s1 = inlined_call_operand.hbm [shape: bf16[128,256], index: 1, kind: input, shape index: {}]
  %s2 = inlined_call_operand.vmem [shape: f32[1,256], index: 2, kind: input, shape index: {}]
  %s3 = inlined_call_operand.hbm [shape: bf16[256,128], index: 3, kind: input, shape index: {}]
  %s4 = inlined_call_operand.vmem [shape: f32[1,128], index: 4, kind: input, shape index: {}]
  %s5 = inlined_call_operand.hbm [shape: bf16[2,128], index: 5, kind: output, shape index: {}]
  %s6 = sld [smem:[#allocation0]]
  $region42: #{tpu_custom_call.1} parent=0
    _
  %s8 = ssub.s32 1, %s6
  %s9 = scalar_select 0, %s8, %s6
  $region1: #{tpu_custom_call.1} parent=0
    #allocation2 [shape = 'u8[512]{0}', space=vmem, size = 0x400, scoped, tag = 'input window, operand 0, single buffered']
    #allocation3 [shape = 's32[1]{0}', space=sflag, size = 0x4, scoped, tag = 'scoped memory for tpu_custom_call.1']
    #allocation4 [shape = 's32[1]{0}', space=sflag, size = 0x4, scoped, tag = 'scoped memory for tpu_custom_call.1']
    #allocation5 [shape = 'u8[65536]{0}', space=vmem, size = 0x10000, scoped, tag = 'input window, operand 1, single buffered']
    #allocation6 [shape = 's32[1]{0}', space=sflag, size = 0x4, scoped, tag = 'scoped memory for tpu_custom_call.1']
    #allocation7 [shape = 'u8[65536]{0}', space=vmem, size = 0x10000, scoped, tag = 'input window, operand 3, single buffered']
    #allocation8 [shape = 'u8[512]{0}', space=vmem, size = 0x400, scoped, tag = 'output window, operand 0, single buffered']
    %10 = vsyncpa [#allocation3], 0
    %11 = vsyncpa [#allocation6], 0
    %12 = vsyncpa [#allocation4], 0
    // Predicated region
    $region2: #{tpu_custom_call.1} parent=1 // pred_check
      _
    $region3: #{tpu_custom_call.1} parent=1 // pred_check_branch
      %14 = sbr.rel (0) target = $region5
    $region4: #{tpu_custom_call.1} parent=1 // pred_region
      %s16 = ssub.s32 16, 16
      %17 = vsyncadd [#allocation3], %s16
      %s19 = sshll.u32 [#allocation2], 4
      %s20 = int_to_ptr.vmem [resolvable:$true] %s19
      %22 = dma.hbm_to_vmem [thread:$0]  %s0, 16, %s20, [#allocation3]
    $region5: #{tpu_custom_call.1} parent=1 // pred_fallthru
      _
    // Predicated region
    $region6: #{tpu_custom_call.1} parent=1 // pred_check
      _
    $region7: #{tpu_custom_call.1} parent=1 // pred_check_branch
      %24 = sbr.rel (0) target = $region9
    $region8: #{tpu_custom_call.1} parent=1 // pred_region
      %s26 = ssub.s32 2048, 2048
      %27 = vsyncadd [#allocation6], %s26
      %s28 = sshll.u32 [#allocation5], 4
      %s29 = int_to_ptr.vmem [resolvable:$true] %s28
      %34 = dma.hbm_to_vmem [thread:$0]  %s1, 2048, %s29, [#allocation6], 128, 128, 8
    $region9: #{tpu_custom_call.1} parent=1 // pred_fallthru
      _
    // Predicated region
    $region10: #{tpu_custom_call.1} parent=1 // pred_check
      _
    $region11: #{tpu_custom_call.1} parent=1 // pred_check_branch
      %36 = sbr.rel (0) target = $region13
    $region12: #{tpu_custom_call.1} parent=1 // pred_region
      _
    $region13: #{tpu_custom_call.1} parent=1 // pred_fallthru
      _
    // Predicated region
    $region14: #{tpu_custom_call.1} parent=1 // pred_check
      _
    $region15: #{tpu_custom_call.1} parent=1 // pred_check_branch
      %38 = sbr.rel (0) target = $region17
    $region16: #{tpu_custom_call.1} parent=1 // pred_region
      %s40 = ssub.s32 2048, 2048
      %41 = vsyncadd [#allocation6], %s40
      %s42 = sshll.u32 [#allocation7], 4
      %s43 = int_to_ptr.vmem [resolvable:$true] %s42
      %48 = dma.hbm_to_vmem [thread:$0]  %s3, 2048, %s43, [#allocation6], 64, 64, 4
    $region17: #{tpu_custom_call.1} parent=1 // pred_fallthru
      _
    // Predicated region
    $region18: #{tpu_custom_call.1} parent=1 // pred_check
      _
    $region19: #{tpu_custom_call.1} parent=1 // pred_check_branch
      %50 = sbr.rel (0) target = $region21
    $region20: #{tpu_custom_call.1} parent=1 // pred_region
      _
    $region21: #{tpu_custom_call.1} parent=1 // pred_fallthru
      _
    // Predicated region
    $region22: #{tpu_custom_call.1} parent=1 // pred_check
      _
    $region23: #{tpu_custom_call.1} parent=1 // pred_check_branch
      %52 = sbr.rel (0) target = $region25
    $region24: #{tpu_custom_call.1} parent=1 // pred_region
      %53 = dma.done [#allocation3], 16
    $region25: #{tpu_custom_call.1} parent=1 // pred_fallthru
      _
    // Predicated region
    $region26: #{tpu_custom_call.1} parent=1 // pred_check
      _
    $region27: #{tpu_custom_call.1} parent=1 // pred_check_branch
      %55 = sbr.rel (0) target = $region29
    $region28: #{tpu_custom_call.1} parent=1 // pred_region
      %56 = dma.done [#allocation6], 2048
    $region29: #{tpu_custom_call.1} parent=1 // pred_fallthru
      _
    // Predicated region
    $region30: #{tpu_custom_call.1} parent=1 // pred_check
      _
    $region31: #{tpu_custom_call.1} parent=1 // pred_check_branch
      %58 = sbr.rel (0) target = $region33
    $region32: #{tpu_custom_call.1} parent=1 // pred_region
      %59 = dma.done [#allocation6], 2048
    $region33: #{tpu_custom_call.1} parent=1 // pred_fallthru
      _
    %v61 = vld [vmem:[#allocation2] sm:$0x1]
    %v62 = vld [vmem:[#allocation5] sm:$0xff]
    %v63 = vld [vmem:[#allocation5 + $0x8] sm:$0xff]
    %v64 = vld [vmem:[#allocation5 + $0x10] sm:$0xff]
    %v65 = vld [vmem:[#allocation5 + $0x18] sm:$0xff]
    %v66 = vld [vmem:[#allocation5 + $0x20] sm:$0xff]
    %v67 = vld [vmem:[#allocation5 + $0x28] sm:$0xff]
    %v68 = vld [vmem:[#allocation5 + $0x30] sm:$0xff]
    %v69 = vld [vmem:[#allocation5 + $0x38] sm:$0xff]
    %v70 = vld [vmem:[#allocation5 + $0x40] sm:$0xff]
    %v71 = vld [vmem:[#allocation5 + $0x48] sm:$0xff]
    %v72 = vld [vmem:[#allocation5 + $0x50] sm:$0xff]
    %v73 = vld [vmem:[#allocation5 + $0x58] sm:$0xff]
    %v74 = vld [vmem:[#allocation5 + $0x60] sm:$0xff]
    %v75 = vld [vmem:[#allocation5 + $0x68] sm:$0xff]
    %v76 = vld [vmem:[#allocation5 + $0x70] sm:$0xff]
    %v77 = vld [vmem:[#allocation5 + $0x78] sm:$0xff]
    %v78 = vld [vmem:[%s2] sm:$0x3]
    %v80 = vlaneseq
    %v81 = vshrl.u32 %v80, 7
    %v82 = vsub.s32 0, %v81
    %v83 = vrot.slane %v78, %v82
    %v84 = vlaneseq
    %v85 = vshrl.u32 %v84, 7
    %v86 = vsub.s32 1, %v85
    %v87 = vrot.slane %v78, %v86
    %v106 = vunpack.c.l.b16 %v62
    %v107 = vunpack.c.h.b16 %v62
    %v108 = vunpack.c.l.b16 %v63
    %v109 = vunpack.c.h.b16 %v63
    %v110 = vunpack.c.l.b16 %v64
    %v111 = vunpack.c.h.b16 %v64
    %v112 = vunpack.c.l.b16 %v65
    %v113 = vunpack.c.h.b16 %v65
    %v114 = vunpack.c.l.b16 %v66
    %v115 = vunpack.c.h.b16 %v66
    %v116 = vunpack.c.l.b16 %v67
    %v117 = vunpack.c.h.b16 %v67
    %v118 = vunpack.c.l.b16 %v68
    %v119 = vunpack.c.h.b16 %v68
    %v120 = vunpack.c.l.b16 %v69
    %v121 = vunpack.c.h.b16 %v69
    %v122 = vunpack.c.l.b16 %v70
    %v123 = vunpack.c.h.b16 %v70
    %v124 = vunpack.c.l.b16 %v71
    %v125 = vunpack.c.h.b16 %v71
    %v126 = vunpack.c.l.b16 %v72
    %v127 = vunpack.c.h.b16 %v72
    %v128 = vunpack.c.l.b16 %v73
    %v129 = vunpack.c.h.b16 %v73
    %v130 = vunpack.c.l.b16 %v74
    %v131 = vunpack.c.h.b16 %v74
    %v132 = vunpack.c.l.b16 %v75
    %v133 = vunpack.c.h.b16 %v75
    %v134 = vunpack.c.l.b16 %v76
    %v135 = vunpack.c.h.b16 %v76
    %v136 = vunpack.c.l.b16 %v77
    %v137 = vunpack.c.h.b16 %v77
    %v138 = vpack.c.b16 %v108, %v106
    %v139 = vpack.c.b16 %v109, %v107
    %v140 = vpack.c.b16 %v112, %v110
    %v141 = vpack.c.b16 %v113, %v111
    %v142 = vpack.c.b16 %v116, %v114
    %v143 = vpack.c.b16 %v117, %v115
    %v144 = vpack.c.b16 %v120, %v118
    %v145 = vpack.c.b16 %v121, %v119
    %v146 = vpack.c.b16 %v124, %v122
    %v147 = vpack.c.b16 %v125, %v123
    %v148 = vpack.c.b16 %v128, %v126
    %v149 = vpack.c.b16 %v129, %v127
    %v150 = vpack.c.b16 %v132, %v130
    %v151 = vpack.c.b16 %v133, %v131
    %v152 = vpack.c.b16 %v136, %v134
    %v153 = vpack.c.b16 %v137, %v135
    %170 = vmatprep.subr.bf16.mxu0 %v139
    %171 = vmatpush1.bf16.msra.mxu0 %v138
    %172 = vmatprep.subr.bf16.mxu0 %v141
    %173 = vmatpush1.bf16.msra.mxu0 %v140
    %174 = vmatprep.subr.bf16.mxu0 %v143
    %175 = vmatpush1.bf16.msra.mxu0 %v142
    %176 = vmatprep.subr.bf16.mxu0 %v145
    %177 = vmatpush1.bf16.msra.mxu0 %v144
    %178 = vmatprep.subr.bf16.mxu0 %v147
    %179 = vmatpush1.bf16.msra.mxu0 %v146
    %180 = vmatprep.subr.bf16.mxu0 %v149
    %181 = vmatpush1.bf16.msra.mxu0 %v148
    %182 = vmatprep.subr.bf16.mxu0 %v151
    %183 = vmatpush1.bf16.msra.mxu0 %v150
    %184 = vmatprep.subr.bf16.mxu0 %v153
    %185 = vmatpush1.bf16.msra.mxu0 %v152
    %186 = vmatprep.subr.bf16.mxu0 0
    %187 = vmatpush1.bf16.msra.mxu0 0
    %188 = vmatprep.subr.bf16.mxu0 0
    %189 = vmatpush1.bf16.msra.mxu0 0
    %190 = vmatprep.subr.bf16.mxu0 0
    %191 = vmatpush1.bf16.msra.mxu0 0
    %192 = vmatprep.subr.bf16.mxu0 0
    %193 = vmatpush1.bf16.msra.mxu0 0
    %194 = vmatprep.subr.bf16.mxu0 0
    %195 = vmatpush1.bf16.msra.mxu0 0
    %196 = vmatprep.subr.bf16.mxu0 0
    %197 = vmatpush1.bf16.msra.mxu0 0
    %198 = vmatprep.subr.bf16.mxu0 0
    %199 = vmatpush1.bf16.msra.mxu0 0
    %200 = vmatprep.subr.bf16.mxu0 0
    %201 = vmatpush1.bf16.msra.mxu0 0
    %202 = vmatprep.mubr.bf16.mxu0 0
    %203 = vmatmul.mubr.bf16.gmra.mrb[0].mxu0 %v61
    %v204 = vpop.f32.mrb[0].mxu0
    %v205 = vadd.f32 %v83, %v204
    %v206 = vpop.f32.mrb[0].mxu0
    %v207 = vadd.f32 %v87, %v206
    %v208 = vpop.f32.mrb[0].mxu0
    %v209 = vpop.f32.mrb[0].mxu0
    %210 = vdwg.mxu0
    %v211 = vxor.u32 %v205, 2147483648
    %v212 = vxor.u32 %v207, 2147483648
    %v213 = vmul.f32 %v211, 1.442695
    %v214 = vpow.pop %v213
    %v215 = vmul.f32 %v212, 1.442695
    %v216 = vpow.pop %v215
    %v217 = vadd.f32 %v214, 1.0
    %v218 = vadd.f32 %v216, 1.0
    %v219 = vrcp.pop %v217
    %v220 = vmul.f32 1.0, %v219
    %v221 = vrcp.pop %v218
    %v222 = vmul.f32 1.0, %v221
    %v223 = vmul.f32 %v205, %v220
    %v224 = vmul.f32 %v207, %v222
    %v225 = vpack.c.bf16 %v223, %v223
    %v226 = vpack.c.bf16 %v224, %v224
    %v227 = vld [vmem:[#allocation7] sm:$0xf]
    %v228 = vld [vmem:[#allocation7 + $0x4] sm:$0xf]
    %v229 = vld [vmem:[#allocation7 + $0x8] sm:$0xf]
    %v230 = vld [vmem:[#allocation7 + $0xc] sm:$0xf]
    %v231 = vld [vmem:[#allocation7 + $0x10] sm:$0xf]
    %v232 = vld [vmem:[#allocation7 + $0x14] sm:$0xf]
    %v233 = vld [vmem:[#allocation7 + $0x18] sm:$0xf]
    %v234 = vld [vmem:[#allocation7 + $0x1c] sm:$0xf]
    %v235 = vld [vmem:[#allocation7 + $0x20] sm:$0xf]
    %v236 = vld [vmem:[#allocation7 + $0x24] sm:$0xf]
    %v237 = vld [vmem:[#allocation7 + $0x28] sm:$0xf]
    %v238 = vld [vmem:[#allocation7 + $0x2c] sm:$0xf]
    %v239 = vld [vmem:[#allocation7 + $0x30] sm:$0xf]
    %v240 = vld [vmem:[#allocation7 + $0x34] sm:$0xf]
    %v241 = vld [vmem:[#allocation7 + $0x38] sm:$0xf]
    %v242 = vld [vmem:[#allocation7 + $0x3c] sm:$0xf]
    %v243 = vld [vmem:[#allocation7 + $0x40] sm:$0xf]
    %v244 = vld [vmem:[#allocation7 + $0x44] sm:$0xf]
    %v245 = vld [vmem:[#allocation7 + $0x48] sm:$0xf]
    %v246 = vld [vmem:[#allocation7 + $0x4c] sm:$0xf]
    %v247 = vld [vmem:[#allocation7 + $0x50] sm:$0xf]
    %v248 = vld [vmem:[#allocation7 + $0x54] sm:$0xf]
    %v249 = vld [vmem:[#allocation7 + $0x58] sm:$0xf]
    %v250 = vld [vmem:[#allocation7 + $0x5c] sm:$0xf]
    %v251 = vld [vmem:[#allocation7 + $0x60] sm:$0xf]
    %v252 = vld [vmem:[#allocation7 + $0x64] sm:$0xf]
    %v253 = vld [vmem:[#allocation7 + $0x68] sm:$0xf]
    %v254 = vld [vmem:[#allocation7 + $0x6c] sm:$0xf]
    %v255 = vld [vmem:[#allocation7 + $0x70] sm:$0xf]
    %v256 = vld [vmem:[#allocation7 + $0x74] sm:$0xf]
    %v257 = vld [vmem:[#allocation7 + $0x78] sm:$0xf]
    %v258 = vld [vmem:[#allocation7 + $0x7c] sm:$0xf]
    %v259 = vld [vmem:[%s4] sm:$0x1]
    %v261 = vlaneseq
    %v262 = vshrl.u32 %v261, 7
    %v263 = vsub.s32 0, %v262
    %v264 = vrot.slane %v259, %v263
    %v298 = vunpack.c.l.b16 %v227
    %v299 = vunpack.c.l.b16 %v228
    %v300 = vunpack.c.l.b16 %v229
    %v301 = vunpack.c.l.b16 %v230
    %v302 = vunpack.c.l.b16 %v231
    %v303 = vunpack.c.l.b16 %v232
    %v304 = vunpack.c.l.b16 %v233
    %v305 = vunpack.c.l.b16 %v234
    %v306 = vunpack.c.l.b16 %v235
    %v307 = vunpack.c.l.b16 %v236
    %v308 = vunpack.c.l.b16 %v237
    %v309 = vunpack.c.l.b16 %v238
    %v310 = vunpack.c.l.b16 %v239
    %v311 = vunpack.c.l.b16 %v240
    %v312 = vunpack.c.l.b16 %v241
    %v313 = vunpack.c.l.b16 %v242
    %v314 = vunpack.c.l.b16 %v243
    %v315 = vunpack.c.l.b16 %v244
    %v316 = vunpack.c.l.b16 %v245
    %v317 = vunpack.c.l.b16 %v246
    %v318 = vunpack.c.l.b16 %v247
    %v319 = vunpack.c.l.b16 %v248
    %v320 = vunpack.c.l.b16 %v249
    %v321 = vunpack.c.l.b16 %v250
    %v322 = vunpack.c.l.b16 %v251
    %v323 = vunpack.c.l.b16 %v252
    %v324 = vunpack.c.l.b16 %v253
    %v325 = vunpack.c.l.b16 %v254
    %v326 = vunpack.c.l.b16 %v255
    %v327 = vunpack.c.l.b16 %v256
    %v328 = vunpack.c.l.b16 %v257
    %v329 = vunpack.c.l.b16 %v258
    %v330 = vpack.c.b16 %v299, %v298
    %v331 = vpack.c.b16 %v301, %v300
    %v332 = vpack.c.b16 %v303, %v302
    %v333 = vpack.c.b16 %v305, %v304
    %v334 = vpack.c.b16 %v307, %v306
    %v335 = vpack.c.b16 %v309, %v308
    %v336 = vpack.c.b16 %v311, %v310
    %v337 = vpack.c.b16 %v313, %v312
    %v338 = vpack.c.b16 %v315, %v314
    %v339 = vpack.c.b16 %v317, %v316
    %v340 = vpack.c.b16 %v319, %v318
    %v341 = vpack.c.b16 %v321, %v320
    %v342 = vpack.c.b16 %v323, %v322
    %v343 = vpack.c.b16 %v325, %v324
    %v344 = vpack.c.b16 %v327, %v326
    %v345 = vpack.c.b16 %v329, %v328
    %362 = vmatprep.subr.bf16.mxu0 0
    %363 = vmatpush1.bf16.msra.mxu0 %v330
    %364 = vmatprep.subr.bf16.mxu0 0
    %365 = vmatpush1.bf16.msra.mxu0 %v331
    %366 = vmatprep.subr.bf16.mxu0 0
    %367 = vmatpush1.bf16.msra.mxu0 %v332
    %368 = vmatprep.subr.bf16.mxu0 0
    %369 = vmatpush1.bf16.msra.mxu0 %v333
    %370 = vmatprep.subr.bf16.mxu0 0
    %371 = vmatpush1.bf16.msra.mxu0 %v334
    %372 = vmatprep.subr.bf16.mxu0 0
    %373 = vmatpush1.bf16.msra.mxu0 %v335
    %374 = vmatprep.subr.bf16.mxu0 0
    %375 = vmatpush1.bf16.msra.mxu0 %v336
    %376 = vmatprep.subr.bf16.mxu0 0
    %377 = vmatpush1.bf16.msra.mxu0 %v337
    %378 = vmatprep.subr.bf16.mxu0 0
    %379 = vmatpush1.bf16.msra.mxu0 %v338
    %380 = vmatprep.subr.bf16.mxu0 0
    %381 = vmatpush1.bf16.msra.mxu0 %v339
    %382 = vmatprep.subr.bf16.mxu0 0
    %383 = vmatpush1.bf16.msra.mxu0 %v340
    %384 = vmatprep.subr.bf16.mxu0 0
    %385 = vmatpush1.bf16.msra.mxu0 %v341
    %386 = vmatprep.subr.bf16.mxu0 0
    %387 = vmatpush1.bf16.msra.mxu0 %v342
    %388 = vmatprep.subr.bf16.mxu0 0
    %389 = vmatpush1.bf16.msra.mxu0 %v343
    %390 = vmatprep.subr.bf16.mxu0 0
    %391 = vmatpush1.bf16.msra.mxu0 %v344
    %392 = vmatprep.subr.bf16.mxu0 0
    %393 = vmatpush1.bf16.msra.mxu0 %v345
    %394 = vmatprep.mubr.bf16.mxu0 %v226
    %395 = vmatmul.mubr.bf16.gmra.mrb[0].mxu0 %v225
    %v396 = vpop.f32.mrb[0].mxu0
    %v397 = vadd.f32 %v264, %v396
    %v398 = vpop.f32.mrb[0].mxu0
    %v399 = vpop.f32.mrb[0].mxu0
    %v400 = vpop.f32.mrb[0].mxu0
    %401 = vdwg.mxu0
    %v402 = vpack.c.bf16 %v397, %v397
    %403 = vst [vmem:[#allocation8] sm:$0x1] %v402
    // Predicated region
    $region34: #{tpu_custom_call.1} parent=1 // pred_check
      _
    $region35: #{tpu_custom_call.1} parent=1 // pred_check_branch
      %405 = sbr.rel (0) target = $region37
    $region36: #{tpu_custom_call.1} parent=1 // pred_region
      %s407 = ssub.s32 16, 16
      %408 = vsyncadd [#allocation4], %s407
      %s410 = sshll.u32 [#allocation8], 4
      %s411 = int_to_ptr.vmem [resolvable:$true] %s410
      %413 = dma.vmem_to_hbm [thread:$0]  %s411, 16, %s5, [#allocation4]
    $region37: #{tpu_custom_call.1} parent=1 // pred_fallthru
      _
    // Predicated region
    $region38: #{tpu_custom_call.1} parent=1 // pred_check
      _
    $region39: #{tpu_custom_call.1} parent=1 // pred_check_branch
      %415 = sbr.rel (0) target = $region41
    $region40: #{tpu_custom_call.1} parent=1 // pred_region
      %416 = dma.done [#allocation4], 16
    $region41: #{tpu_custom_call.1} parent=1 // pred_fallthru
      _
    %417 = vsyncpa [#allocation3], 1
    %418 = vsyncpa [#allocation6], 1
    %419 = vsyncpa [#allocation4], 1

</llo_original>
